<compile_context>
chip_gen: v6e
topology: v6e:2x2x1
jax: 0.10.0
libtpu: 0.0.40
codegen_flags: <defaults>
</compile_context>

<pallas_src>
import jax
import jax.numpy as jnp
from jax.experimental import pallas as pl
from jax.experimental.pallas import tpu as pltpu

OBS_DIM = 4       # observation dimension (CartPole-style)
ACT_DIM = 2       # action space size
HIDDEN = 128      # num_hidden in NNPolicy.__init__
LANE = 128        # TPU lane width (hidden->logits weight padded to this)


def _round_up(n, m):
    return ((n + m - 1) // m) * m


def _mlp_policy_kernel(x_ref, w1_ref, b1_ref, w2_ref, b2_ref, out_ref):
    # x_ref: [TB, OBS_DIM] f32 (un-padded; last block dim == full array dim).
    x = x_ref[...]
    w1 = w1_ref[...]                                    # [OBS_DIM, HIDDEN] f32

    # ---- layer 1 on the MXU (K=4 is padded internally by the MXU; rides the
    # vext slot instead of burning VALU/XLU on lane-broadcast FMAs). ----
    h = jnp.dot(x, w1, preferred_element_type=jnp.float32) + b1_ref[...]
    h = jnp.maximum(h, 0.0)                             # ReLU, [TB, HIDDEN] f32

    # ---- layer 2 on the MXU, lane-dense N=128 (padded w2 columns are zero).
    # If w2 is bf16, h is cast for the MXU only; accumulation stays f32. ----
    w2 = w2_ref[...]
    logits = jnp.dot(h.astype(w2.dtype), w2, preferred_element_type=jnp.float32)
    logits = logits + b2_ref[...]                       # [TB, LANE] f32

    # ---- 2-class softmax == sigmoid of the logit difference. Only the two
    # real columns are touched; padded lanes are never read, so no mask, no
    # cross-lane max/sum reductions, a single exp per row, exact division. ----
    l0 = logits[:, 0:1]                                 # [TB, 1]
    l1 = logits[:, 1:2]                                 # [TB, 1]
    d = l1 - l0
    e = jnp.exp(-jnp.abs(d))                            # exp of non-positive arg
    p_max = 1.0 / (1.0 + e)                             # prob of the larger logit
    p0 = jnp.where(d > 0, 1.0 - p_max, p_max)           # P(action 0)
    p1 = 1.0 - p0                                       # rows sum to 1 exactly (±1 ulp)
    out_ref[...] = jnp.concatenate([p0, p1], axis=-1)   # narrow [TB, 2] writeback


def nn_policy_forward(x, w1, b1, w2, b2, *, block_b=1024, matmul_in_bf16=True):
    """x: [B, OBS_DIM] f32; returns softmax action probs [B, ACT_DIM] f32."""
    B = x.shape[0]
    TB = min(block_b, _round_up(B, 8))                  # sublane-aligned batch tile
    if B >= 4 * 8:
        # Keep >= 4 grid steps so the "parallel" axis shards across v7x's two
        # TensorCores with pipeline depth >= 2 per core (no effect on v5e/v6e
        # correctness; just a tiling choice).
        TB = min(TB, _round_up(pl.cdiv(B, 4), 8))
    Bp = _round_up(B, TB)                               # padded batch (ragged B)
    x_p = jnp.pad(x, ((0, Bp - B), (0, 0))) if Bp != B else x

    # Tiny weight/bias prep (one-time, negligible HBM cost). Padded w2/b2
    # columns are zero; the kernel never reads the padded logit columns.
    b1_p = b1.reshape(1, HIDDEN).astype(jnp.float32)
    w2_p = jnp.pad(w2, ((0, 0), (0, LANE - ACT_DIM)))                   # [HIDDEN, LANE]
    b2_p = jnp.pad(b2.reshape(1, ACT_DIM), ((0, 0), (0, LANE - ACT_DIM)))
    if matmul_in_bf16:
        # bf16 MXU operands with f32 accumulation (valid on v5e/v6e/v7x MXUs).
        w2_p = w2_p.astype(jnp.bfloat16)

    grid = (Bp // TB,)
    cost = pl.CostEstimate(
        flops=2 * Bp * (OBS_DIM * HIDDEN + HIDDEN * LANE),
        transcendentals=Bp,                              # one exp per row
        bytes_accessed=4 * (Bp * OBS_DIM + OBS_DIM * HIDDEN + HIDDEN
                            + HIDDEN * LANE + LANE + Bp * ACT_DIM),
    )

    resident = dict(pipeline_mode=pl.Buffered(1))        # VMEM-resident, no dbl-buffer
    out = pl.pallas_call(
        _mlp_policy_kernel,
        out_shape=jax.ShapeDtypeStruct((Bp, ACT_DIM), jnp.float32),
        grid=grid,
        in_specs=[
            pl.BlockSpec((TB, OBS_DIM), lambda i: (i, 0)),              # batch-tiled x
            pl.BlockSpec((OBS_DIM, HIDDEN), lambda i: (0, 0), **resident),
            pl.BlockSpec((1, HIDDEN), lambda i: (0, 0), **resident),
            pl.BlockSpec((HIDDEN, LANE), lambda i: (0, 0), **resident),
            pl.BlockSpec((1, LANE), lambda i: (0, 0), **resident),
        ],
        out_specs=pl.BlockSpec((TB, ACT_DIM), lambda i: (i, 0)),        # narrow writeback
        compiler_params=pltpu.CompilerParams(
            dimension_semantics=("parallel",),           # megacore / v7x 2-TC sharding
            vmem_limit_bytes=32 * 1024 * 1024),          # explicit (v5e default is 16 MiB)
        cost_estimate=cost,
    )(x_p, w1, b1_p, w2_p, b2_p)

    return out[:B] if Bp != B else out


def _reference_forward(x, w1, b1, w2, b2):
    h = jnp.maximum(x @ w1 + b1, 0.0)
    logits = h @ w2 + b2
    return jax.nn.softmax(logits, axis=-1)


def _init_params(key):
    """Deterministic init mimicking PyTorch nn.Linear (uniform +/- 1/sqrt(fan_in))."""
    k1, k2, k3, k4 = jax.random.split(key, 4)
    bound1 = 1.0 / jnp.sqrt(OBS_DIM)
    bound2 = 1.0 / jnp.sqrt(HIDDEN)
    w1 = jax.random.uniform(k1, (OBS_DIM, HIDDEN), jnp.float32, -bound1, bound1)
    b1 = jax.random.uniform(k2, (HIDDEN,), jnp.float32, -bound1, bound1)
    w2 = jax.random.uniform(k3, (HIDDEN, ACT_DIM), jnp.float32, -bound2, bound2)
    b2 = jax.random.uniform(k4, (ACT_DIM,), jnp.float32, -bound2, bound2)
    return w1, b1, w2, b2


if __name__ == "__main__":
    key = jax.random.PRNGKey(0)
    k_params, k_x = jax.random.split(key)
    w1, b1, w2, b2 = _init_params(k_params)

    # Small batch (single tile, single grid step).
    B = 8
    x = jax.random.normal(k_x, (B, OBS_DIM), jnp.float32)
    ref = _reference_forward(x, w1, b1, w2, b2)

    # Default path: bf16 MXU operands for layer 2 (f32 accumulation).
    probs = jax.block_until_ready(nn_policy_forward(x, w1, b1, w2, b2))
    assert probs.shape == (B, ACT_DIM)
    assert jnp.allclose(probs, ref, atol=2e-2, rtol=2e-2), "bf16-path mismatch"
    assert jnp.allclose(jnp.sum(probs, axis=-1), 1.0, atol=1e-5), "rows must sum to 1"

    # Full-f32 path matches the f32 PyTorch reference tightly.
    probs_f32 = jax.block_until_ready(
        nn_policy_forward(x, w1, b1, w2, b2, matmul_in_bf16=False))
    assert jnp.allclose(probs_f32, ref, atol=1e-3, rtol=1e-3), "f32-path mismatch"
    assert jnp.allclose(jnp.sum(probs_f32, axis=-1), 1.0, atol=1e-5)

    # Larger ragged batch: exercises multi-step grid, >=4-step cap, and padding.
    B2 = 200
    x2 = jax.random.normal(jax.random.PRNGKey(1), (B2, OBS_DIM), jnp.float32)
    ref2 = _reference_forward(x2, w1, b1, w2, b2)
    probs2 = jax.block_until_ready(
        nn_policy_forward(x2, w1, b1, w2, b2, matmul_in_bf16=False))
    assert probs2.shape == (B2, ACT_DIM)
    assert jnp.allclose(probs2, ref2, atol=1e-3, rtol=1e-3), "multi-tile mismatch"
    assert jnp.allclose(jnp.sum(probs2, axis=-1), 1.0, atol=1e-5)

    # Ragged tiny batch (in-wrapper batch padding path, same kernel shapes).
    x3 = x[:3]
    probs3 = jax.block_until_ready(
        nn_policy_forward(x3, w1, b1, w2, b2, matmul_in_bf16=False))
    ref3 = _reference_forward(x3, w1, b1, w2, b2)
    assert probs3.shape == (3, ACT_DIM)
    assert jnp.allclose(probs3, ref3, atol=1e-3, rtol=1e-3), "ragged-batch mismatch"

    # TODO(synk): get_probs / sample_action (torch.multinomial) are host-side
    # utilities outside forward(); not implemented as kernels.
    print("KERNEL_OK")
</pallas_src>

<mosaic_0001>
module attributes {stable_mosaic.version = 11 : i64} {
  func.func @_mlp_policy_kernel(%arg0: i32, %arg1: memref<8x4xf32, #tpu.memory_space<vmem>>, %arg2: memref<4x128xf32, #tpu.memory_space<vmem>>, %arg3: memref<1x128xf32, #tpu.memory_space<vmem>>, %arg4: memref<128x128xbf16, #tpu.memory_space<vmem>>, %arg5: memref<1x128xf32, #tpu.memory_space<vmem>>, %arg6: memref<8x2xf32, #tpu.memory_space<vmem>>) attributes {dimension_semantics = [#tpu.dimension_semantics<parallel>], iteration_bounds = array<i64: 1>, scalar_prefetch = 0 : i64, scratch_operands = 0 : i64, tpu.core_type = #tpu.core_type<tc>, window_params = [{transform_indices = @transform_0, window_bounds = array<i64: 8, 4>}, {pipeline_mode = #tpu.pipeline_mode<synchronous>, transform_indices = @transform_1, window_bounds = array<i64: 4, 128>}, {pipeline_mode = #tpu.pipeline_mode<synchronous>, transform_indices = @transform_2, window_bounds = array<i64: 1, 128>}, {pipeline_mode = #tpu.pipeline_mode<synchronous>, transform_indices = @transform_3, window_bounds = array<i64: 128, 128>}, {pipeline_mode = #tpu.pipeline_mode<synchronous>, transform_indices = @transform_4, window_bounds = array<i64: 1, 128>}, {transform_indices = @transform_5, window_bounds = array<i64: 8, 2>}]} {
    %c0 = arith.constant 0 : index
    %c0_0 = arith.constant 0 : index
    %0 = vector.load %arg1[%c0, %c0_0] : memref<8x4xf32, #tpu.memory_space<vmem>>, vector<8x4xf32>
    %c0_1 = arith.constant 0 : index
    %c0_2 = arith.constant 0 : index
    %1 = vector.load %arg2[%c0_1, %c0_2] : memref<4x128xf32, #tpu.memory_space<vmem>>, vector<4x128xf32>
    %cst = arith.constant dense<0.000000e+00> : vector<8x128xf32>
    %2 = tpu.matmul %0, %1, %cst {dimension_numbers = #tpu.dot_dimension_numbers<[1], [0], [0], [1], [0, 0, 1, 1], [], []>} : vector<8x4xf32>, vector<4x128xf32>, vector<8x128xf32> -> vector<8x128xf32>
    %c0_3 = arith.constant 0 : index
    %c0_4 = arith.constant 0 : index
    %3 = vector.load %arg3[%c0_3, %c0_4] : memref<1x128xf32, #tpu.memory_space<vmem>>, vector<1x128xf32>
    %4 = vector.broadcast %3 : vector<1x128xf32> to vector<8x128xf32>
    %5 = arith.addf %2, %4 : vector<8x128xf32>
    %cst_5 = arith.constant 0.000000e+00 : f32
    %6 = vector.broadcast %cst_5 : f32 to vector<8x128xf32>
    %7 = arith.maximumf %5, %6 : vector<8x128xf32>
    %c0_6 = arith.constant 0 : index
    %c0_7 = arith.constant 0 : index
    %8 = vector.load %arg4[%c0_6, %c0_7] : memref<128x128xbf16, #tpu.memory_space<vmem>>, vector<128x128xbf16>
    %9 = arith.truncf %7 : vector<8x128xf32> to vector<8x128xbf16>
    %cst_8 = arith.constant dense<0.000000e+00> : vector<8x128xf32>
    %10 = tpu.matmul %9, %8, %cst_8 {dimension_numbers = #tpu.dot_dimension_numbers<[1], [0], [0], [1], [0, 0, 1, 1], [], []>} : vector<8x128xbf16>, vector<128x128xbf16>, vector<8x128xf32> -> vector<8x128xf32>
    %c0_9 = arith.constant 0 : index
    %c0_10 = arith.constant 0 : index
    %11 = vector.load %arg5[%c0_9, %c0_10] : memref<1x128xf32, #tpu.memory_space<vmem>>, vector<1x128xf32>
    %12 = vector.broadcast %11 : vector<1x128xf32> to vector<8x128xf32>
    %13 = arith.addf %10, %12 : vector<8x128xf32>
    %14 = vector.extract_strided_slice %13 {offsets = [0, 0], sizes = [8, 1], strides = [1, 1]} : vector<8x128xf32> to vector<8x1xf32>
    %15 = vector.extract_strided_slice %13 {offsets = [0, 1], sizes = [8, 1], strides = [1, 1]} : vector<8x128xf32> to vector<8x1xf32>
    %16 = arith.subf %15, %14 : vector<8x1xf32>
    %17 = math.absf %16 : vector<8x1xf32>
    %cst_11 = arith.constant 0.000000e+00 : f32
    %18 = vector.broadcast %cst_11 : f32 to vector<8x1xf32>
    %19 = arith.subf %18, %17 : vector<8x1xf32>
    %20 = math.exp %19 : vector<8x1xf32>
    %cst_12 = arith.constant 1.000000e+00 : f32
    %21 = vector.broadcast %cst_12 : f32 to vector<8x1xf32>
    %22 = arith.addf %21, %20 : vector<8x1xf32>
    %cst_13 = arith.constant 1.000000e+00 : f32
    %23 = vector.broadcast %cst_13 : f32 to vector<8x1xf32>
    %24 = arith.divf %23, %22 : vector<8x1xf32>
    %cst_14 = arith.constant 0.000000e+00 : f32
    %25 = vector.broadcast %cst_14 : f32 to vector<8x1xf32>
    %26 = arith.cmpf ogt, %16, %25 : vector<8x1xf32>
    %cst_15 = arith.constant 1.000000e+00 : f32
    %27 = vector.broadcast %cst_15 : f32 to vector<8x1xf32>
    %28 = arith.subf %27, %24 : vector<8x1xf32>
    %29 = arith.select %26, %28, %24 : vector<8x1xi1>, vector<8x1xf32>
    %cst_16 = arith.constant 1.000000e+00 : f32
    %30 = vector.broadcast %cst_16 : f32 to vector<8x1xf32>
    %31 = arith.subf %30, %29 : vector<8x1xf32>
    %32 = tpu.concatenate %29, %31 in 1 : vector<8x1xf32>, vector<8x1xf32> -> vector<8x2xf32>
    %c0_17 = arith.constant 0 : index
    %c0_18 = arith.constant 0 : index
    %33 = vector.load %arg6[%c0_17, %c0_18] : memref<8x2xf32, #tpu.memory_space<vmem>>, vector<8x2xf32>
    tpu.vector_store %arg6[%c0_17, %c0_18], %32 {strides = array<i32>} : memref<8x2xf32, #tpu.memory_space<vmem>>, vector<8x2xf32>,
    return
  }
  func.func @transform_0(%arg0: i32) -> (i32, i32) {
    %c0_i32 = arith.constant 0 : i32
    %c0_i32_0 = arith.constant 0 : i32
    return %arg0, %c0_i32 : i32, i32
  }
  func.func @transform_1(%arg0: i32) -> (i32, i32) {
    %c0_i32 = arith.constant 0 : i32
    %c0_i32_0 = arith.constant 0 : i32
    %c0_i32_1 = arith.constant 0 : i32
    return %c0_i32, %c0_i32_0 : i32, i32
  }
  func.func @transform_2(%arg0: i32) -> (i32, i32) {
    %c0_i32 = arith.constant 0 : i32
    %c0_i32_0 = arith.constant 0 : i32
    %c0_i32_1 = arith.constant 0 : i32
    return %c0_i32, %c0_i32_0 : i32, i32
  }
  func.func @transform_3(%arg0: i32) -> (i32, i32) {
    %c0_i32 = arith.constant 0 : i32
    %c0_i32_0 = arith.constant 0 : i32
    %c0_i32_1 = arith.constant 0 : i32
    return %c0_i32, %c0_i32_0 : i32, i32
  }
  func.func @transform_4(%arg0: i32) -> (i32, i32) {
    %c0_i32 = arith.constant 0 : i32
    %c0_i32_0 = arith.constant 0 : i32
    %c0_i32_1 = arith.constant 0 : i32
    return %c0_i32, %c0_i32_0 : i32, i32
  }
  func.func @transform_5(%arg0: i32) -> (i32, i32) {
    %c0_i32 = arith.constant 0 : i32
    %c0_i32_0 = arith.constant 0 : i32
    return %arg0, %c0_i32 : i32, i32
  }
}

</mosaic_0001>

<llo_original>
// kernel: tpu_custom_call.1
$region0: #{tpu_custom_call.1}
  #allocation0 [shape = 'u32[]', space=smem, size = 0x4, offset = 0x4, fixed_abs, tag = 'smem constant byte address 0x4 - core index']
  #allocation1 [shape = 'u32[144,128]{1,0:T(1,128)}', space=vmem, size = 0x12000, scoped, tag = 'internal scratch']
  %s0 = inlined_call_operand.vmem [shape: f32[8,4], index: 0, kind: input, shape index: {}]
  %s1 = inlined_call_operand.vmem [shape: f32[4,128], index: 1, kind: input, shape index: {}]
  %s2 = inlined_call_operand.vmem [shape: f32[1,128], index: 2, kind: input, shape index: {}]
  %s3 = inlined_call_operand.hbm [shape: bf16[128,128], index: 3, kind: input, shape index: {}]
  %s4 = inlined_call_operand.vmem [shape: f32[1,128], index: 4, kind: input, shape index: {}]
  %s5 = inlined_call_operand.vmem [shape: f32[8,2], index: 5, kind: output, shape index: {}]
  %s6 = sld [smem:[#allocation0]]
  $region34: #{tpu_custom_call.1} parent=0
    _
  %s8 = ssub.s32 1, %s6
  %s9 = scalar_select 0, %s8, %s6
  $region1: #{tpu_custom_call.1} parent=0
    #allocation2 [shape = 'u8[32768]{0}', space=vmem, size = 0x8000, scoped, tag = 'input window, operand 3, single buffered']
    #allocation3 [shape = 's32[1]{0}', space=sflag, size = 0x4, scoped, tag = 'scoped memory for tpu_custom_call.1']
    %10 = vsyncpa [#allocation3], 0
    // Predicated region
    $region2: #{tpu_custom_call.1} parent=1 // pred_check
      _
    $region3: #{tpu_custom_call.1} parent=1 // pred_check_branch
      %12 = sbr.rel (0) target = $region5
    $region4: #{tpu_custom_call.1} parent=1 // pred_region
      _
    $region5: #{tpu_custom_call.1} parent=1 // pred_fallthru
      _
    // Predicated region
    $region6: #{tpu_custom_call.1} parent=1 // pred_check
      _
    $region7: #{tpu_custom_call.1} parent=1 // pred_check_branch
      %14 = sbr.rel (0) target = $region9
    $region8: #{tpu_custom_call.1} parent=1 // pred_region
      _
    $region9: #{tpu_custom_call.1} parent=1 // pred_fallthru
      _
    // Predicated region
    $region10: #{tpu_custom_call.1} parent=1 // pred_check
      _
    $region11: #{tpu_custom_call.1} parent=1 // pred_check_branch
      %16 = sbr.rel (0) target = $region13
    $region12: #{tpu_custom_call.1} parent=1 // pred_region
      _
    $region13: #{tpu_custom_call.1} parent=1 // pred_fallthru
      _
    // Predicated region
    $region14: #{tpu_custom_call.1} parent=1 // pred_check
      _
    $region15: #{tpu_custom_call.1} parent=1 // pred_check_branch
      %18 = sbr.rel (0) target = $region17
    $region16: #{tpu_custom_call.1} parent=1 // pred_region
      %s20 = ssub.s32 1024, 1024
      %21 = vsyncadd [#allocation3], %s20
      %s22 = sshll.u32 [#allocation2], 4
      %s23 = int_to_ptr.vmem [resolvable:$true] %s22
      %28 = dma.hbm_to_vmem [thread:$0]  %s3, 1024, %s23, [#allocation3], 64, 64, 4
    $region17: #{tpu_custom_call.1} parent=1 // pred_fallthru
      _
    // Predicated region
    $region18: #{tpu_custom_call.1} parent=1 // pred_check
      _
    $region19: #{tpu_custom_call.1} parent=1 // pred_check_branch
      %30 = sbr.rel (0) target = $region21
    $region20: #{tpu_custom_call.1} parent=1 // pred_region
      _
    $region21: #{tpu_custom_call.1} parent=1 // pred_fallthru
      _
    // Predicated region
    $region22: #{tpu_custom_call.1} parent=1 // pred_check
      _
    $region23: #{tpu_custom_call.1} parent=1 // pred_check_branch
      %32 = sbr.rel (0) target = $region25
    $region24: #{tpu_custom_call.1} parent=1 // pred_region
      %33 = dma.done [#allocation3], 1024
    $region25: #{tpu_custom_call.1} parent=1 // pred_fallthru
      _
    %v35 = vld [vmem:[%s0] sm:$0xff]
    %v36 = vld [vmem:[%s1] sm:$0xf]
    %v37 = vld [vmem:[%s2] sm:$0x1]
    %v39 = vlaneseq
    %v40 = vshrl.u32 %v39, 7
    %v41 = vsub.s32 0, %v40
    %v42 = vrot.slane %v37, %v41
    %vm44 = vcmask 31744
    %v46 = vsel %vm44, %v35, 0
    %vm48 = vcmask 1043456
    %v50 = vsel %vm48, %v36, 0
    %52 = vmatprep.subr.mxu0 0.0
    %53 = vmatpush1.msra.mxu0 0.0
    %54 = vmatprep.subr.mxu0 0.0
    %55 = vmatpush1.msra.mxu0 0.0
    %56 = vmatprep.subr.mxu0 0.0
    %57 = vmatpush1.msra.mxu0 0.0
    %58 = vmatprep.subr.mxu0 0.0
    %59 = vmatpush1.msra.mxu0 0.0
    %60 = vmatprep.subr.mxu0 0.0
    %61 = vmatpush1.msra.mxu0 0.0
    %62 = vmatprep.subr.mxu0 0.0
    %63 = vmatpush1.msra.mxu0 0.0
    %64 = vmatprep.subr.mxu0 0.0
    %65 = vmatpush1.msra.mxu0 0.0
    %66 = vmatprep.subr.mxu0 0.0
    %67 = vmatpush1.msra.mxu0 0.0
    %68 = vmatprep.subr.mxu0 0.0
    %69 = vmatpush1.msra.mxu0 0.0
    %70 = vmatprep.subr.mxu0 0.0
    %71 = vmatpush1.msra.mxu0 0.0
    %72 = vmatprep.subr.mxu0 0.0
    %73 = vmatpush1.msra.mxu0 0.0
    %74 = vmatprep.subr.mxu0 0.0
    %75 = vmatpush1.msra.mxu0 0.0
    %76 = vmatprep.subr.mxu0 0.0
    %77 = vmatpush1.msra.mxu0 0.0
    %78 = vmatprep.subr.mxu0 0.0
    %79 = vmatpush1.msra.mxu0 0.0
    %80 = vmatprep.subr.mxu0 0.0
    %81 = vmatpush1.msra.mxu0 0.0
    %82 = vmatprep.subr.mxu0 0.0
    %83 = vmatpush1.msra.mxu0 %v50
    %84 = vmatprep.subr.mxu0 0.0
    %85 = vmatpush2.msra.mxu0 0.0
    %86 = vmatprep.subr.mxu0 0.0
    %87 = vmatpush2.msra.mxu0 0.0
    %88 = vmatprep.subr.mxu0 0.0
    %89 = vmatpush2.msra.mxu0 0.0
    %90 = vmatprep.subr.mxu0 0.0
    %91 = vmatpush2.msra.mxu0 0.0
    %92 = vmatprep.subr.mxu0 0.0
    %93 = vmatpush2.msra.mxu0 0.0
    %94 = vmatprep.subr.mxu0 0.0
    %95 = vmatpush2.msra.mxu0 0.0
    %96 = vmatprep.subr.mxu0 0.0
    %97 = vmatpush2.msra.mxu0 0.0
    %98 = vmatprep.subr.mxu0 0.0
    %99 = vmatpush2.msra.mxu0 0.0
    %100 = vmatprep.subr.mxu0 0.0
    %101 = vmatpush2.msra.mxu0 0.0
    %102 = vmatprep.subr.mxu0 0.0
    %103 = vmatpush2.msra.mxu0 0.0
    %104 = vmatprep.subr.mxu0 0.0
    %105 = vmatpush2.msra.mxu0 0.0
    %106 = vmatprep.subr.mxu0 0.0
    %107 = vmatpush2.msra.mxu0 0.0
    %108 = vmatprep.subr.mxu0 0.0
    %109 = vmatpush2.msra.mxu0 0.0
    %110 = vmatprep.subr.mxu0 0.0
    %111 = vmatpush2.msra.mxu0 0.0
    %112 = vmatprep.subr.mxu0 0.0
    %113 = vmatpush2.msra.mxu0 0.0
    %114 = vmatprep.subr.mxu0 0.0
    %115 = vmatpush2.msra.mxu0 0.0
    %116 = vmatprep.mubr.f32.mxu0 0.0
    %117 = vmatmul.mubr.f32.gmra.mxu0 %v46
    %v118 = vpop.f32.mrf.mxu0
    %v119 = vadd.f32 %v42, %v118
    %v120 = vpop.f32.mrf.mxu0
    %121 = vdwg.mxu0
    %v122 = vmax.f32 %v119, 0.0
    %v123 = vld [vmem:[#allocation2] sm:$0xf]
    %v124 = vld [vmem:[#allocation2 + $0x4] sm:$0xf]
    %v125 = vld [vmem:[#allocation2 + $0x8] sm:$0xf]
    %v126 = vld [vmem:[#allocation2 + $0xc] sm:$0xf]
    %v127 = vld [vmem:[#allocation2 + $0x10] sm:$0xf]
    %v128 = vld [vmem:[#allocation2 + $0x14] sm:$0xf]
    %v129 = vld [vmem:[#allocation2 + $0x18] sm:$0xf]
    %v130 = vld [vmem:[#allocation2 + $0x1c] sm:$0xf]
    %v131 = vld [vmem:[#allocation2 + $0x20] sm:$0xf]
    %v132 = vld [vmem:[#allocation2 + $0x24] sm:$0xf]
    %v133 = vld [vmem:[#allocation2 + $0x28] sm:$0xf]
    %v134 = vld [vmem:[#allocation2 + $0x2c] sm:$0xf]
    %v135 = vld [vmem:[#allocation2 + $0x30] sm:$0xf]
    %v136 = vld [vmem:[#allocation2 + $0x34] sm:$0xf]
    %v137 = vld [vmem:[#allocation2 + $0x38] sm:$0xf]
    %v138 = vld [vmem:[#allocation2 + $0x3c] sm:$0xf]
    %v139 = vpack.c.bf16 %v122, %v122
    %v140 = vld [vmem:[%s4] sm:$0x1]
    %v142 = vlaneseq
    %v143 = vshrl.u32 %v142, 7
    %v144 = vsub.s32 0, %v143
    %v145 = vrot.slane %v140, %v144
    %v163 = vunpack.c.l.b16 %v123
    %v164 = vunpack.c.l.b16 %v124
    %v165 = vunpack.c.l.b16 %v125
    %v166 = vunpack.c.l.b16 %v126
    %v167 = vunpack.c.l.b16 %v127
    %v168 = vunpack.c.l.b16 %v128
    %v169 = vunpack.c.l.b16 %v129
    %v170 = vunpack.c.l.b16 %v130
    %v171 = vunpack.c.l.b16 %v131
    %v172 = vunpack.c.l.b16 %v132
    %v173 = vunpack.c.l.b16 %v133
    %v174 = vunpack.c.l.b16 %v134
    %v175 = vunpack.c.l.b16 %v135
    %v176 = vunpack.c.l.b16 %v136
    %v177 = vunpack.c.l.b16 %v137
    %v178 = vunpack.c.l.b16 %v138
    %v179 = vpack.c.b16 %v164, %v163
    %v180 = vpack.c.b16 %v166, %v165
    %v181 = vpack.c.b16 %v168, %v167
    %v182 = vpack.c.b16 %v170, %v169
    %v183 = vpack.c.b16 %v172, %v171
    %v184 = vpack.c.b16 %v174, %v173
    %v185 = vpack.c.b16 %v176, %v175
    %v186 = vpack.c.b16 %v178, %v177
    %195 = vmatprep.subr.bf16.mxu0 0
    %196 = vmatpush1.bf16.msra.mxu0 %v186
    %197 = vmatprep.subr.bf16.mxu0 0
    %198 = vmatpush1.bf16.msra.mxu0 %v185
    %199 = vmatprep.subr.bf16.mxu0 0
    %200 = vmatpush1.bf16.msra.mxu0 %v184
    %201 = vmatprep.subr.bf16.mxu0 0
    %202 = vmatpush1.bf16.msra.mxu0 %v183
    %203 = vmatprep.subr.bf16.mxu0 0
    %204 = vmatpush1.bf16.msra.mxu0 %v182
    %205 = vmatprep.subr.bf16.mxu0 0
    %206 = vmatpush1.bf16.msra.mxu0 %v181
    %207 = vmatprep.subr.bf16.mxu0 0
    %208 = vmatpush1.bf16.msra.mxu0 %v180
    %209 = vmatprep.subr.bf16.mxu0 0
    %210 = vmatpush1.bf16.msra.mxu0 %v179
    %211 = vmatprep.subr.bf16.mxu0 0
    %212 = vmatpush2.bf16.msra.mxu0 0
    %213 = vmatprep.subr.bf16.mxu0 0
    %214 = vmatpush2.bf16.msra.mxu0 0
    %215 = vmatprep.subr.bf16.mxu0 0
    %216 = vmatpush2.bf16.msra.mxu0 0
    %217 = vmatprep.subr.bf16.mxu0 0
    %218 = vmatpush2.bf16.msra.mxu0 0
    %219 = vmatprep.subr.bf16.mxu0 0
    %220 = vmatpush2.bf16.msra.mxu0 0
    %221 = vmatprep.subr.bf16.mxu0 0
    %222 = vmatpush2.bf16.msra.mxu0 0
    %223 = vmatprep.subr.bf16.mxu0 0
    %224 = vmatpush2.bf16.msra.mxu0 0
    %225 = vmatprep.subr.bf16.mxu0 0
    %226 = vmatpush2.bf16.msra.mxu0 0
    %227 = vmatprep.mubr.bf16.mxu0 0
    %228 = vmatmul.mubr.bf16.gmra.mxu0 %v139
    %v229 = vpop.f32.mrf.mxu0
    %v230 = vadd.f32 %v145, %v229
    %v231 = vpop.f32.mrf.mxu0
    %v232 = vpop.f32.mrf.mxu0
    %v233 = vpop.f32.mrf.mxu0
    %234 = vdwg.mxu0
    %236 = vrot.lane.b32.xlu0 %v230, 1
    %v237 = vpop.permute.xlu0 %236
    %v239 = vsub.f32 %v230, %v237
    %v240 = vand.u32 2147483647, %v239
    %v241 = vsub.f32 0.0, %v240
    %v242 = vmul.f32 %v241, 1.442695
    %v243 = vpow.pop %v242
    %v244 = vadd.f32 %v243, 1.0
    %v245 = vrcp.pop %v244
    %v246 = vmul.f32 1.0, %v245
    %vm247 = vcmp.gt.f32.partialorder %v239, 0.0
    %v248 = vsub.f32 1.0, %v246
    %v249 = vsel %vm247, %v248, %v246
    %v250 = vsub.f32 1.0, %v249
    %252 = vrot.lane.b32.xlu0 %v249, 127
    %v253 = vpop.permute.xlu0 %252
    %vm255 = vcmask 7168
    %v256 = vsel %vm255, %v253, %v250
    %vm257 = vcmask 15360
    %258 = vst.msk [vmem:[%s5] sm:$0xff] %vm257, %v256
    // Predicated region
    $region26: #{tpu_custom_call.1} parent=1 // pred_check
      _
    $region27: #{tpu_custom_call.1} parent=1 // pred_check_branch
      %260 = sbr.rel (0) target = $region29
    $region28: #{tpu_custom_call.1} parent=1 // pred_region
      _
    $region29: #{tpu_custom_call.1} parent=1 // pred_fallthru
      _
    // Predicated region
    $region30: #{tpu_custom_call.1} parent=1 // pred_check
      _
    $region31: #{tpu_custom_call.1} parent=1 // pred_check_branch
      %262 = sbr.rel (0) target = $region33
    $region32: #{tpu_custom_call.1} parent=1 // pred_region
      _
    $region33: #{tpu_custom_call.1} parent=1 // pred_fallthru
      _
    %263 = vsyncpa [#allocation3], 1

</llo_original>
